<compile_context>
chip_gen: v7x
topology: tpu7x:2x2x1
jax: 0.10.0
libtpu: 0.0.40
codegen_flags: <defaults>
</compile_context>

<pallas_src>
import functools

import jax
import jax.numpy as jnp
from jax.experimental import pallas as pl
from jax.experimental.pallas import tpu as pltpu


def _patchify_kernel(x_ref, o_ref, *, r, nH, Wp, HpC):
    # x_ref: (1, r*Wp, H*C)      -- r patch-rows of one image (H and C merged)
    # o_ref: (1, r*nH, Wp, HpC)  -- the r*nH patches produced by that slab
    # out[0, rr*nH + hi, wp, :] = x[0, rr*Wp + wp, hi*HpC : (hi+1)*HpC]
    for rr in range(r):
        for hi in range(nH):
            o_ref[0, rr * nH + hi, :, :] = x_ref[
                0, rr * Wp:(rr + 1) * Wp, hi * HpC:(hi + 1) * HpC
            ]


def patchify(images, patch_height, patch_width):
    """images: (N, W, H, C) -> (N, num_patches, Wp*Hp*C)."""
    N, W, H, C = images.shape
    Hp, Wp = patch_height, patch_width
    assert W % Wp == 0 and H % Hp == 0, "patch dimensions do not evenly divide image"
    nW, nH = W // Wp, H // Hp
    num_patches = nW * nH
    patch_dim = Wp * Hp * C
    HpC = Hp * C

    # Free, layout-preserving merge of trailing (H, C) -> H*C.
    x2 = images.reshape(N, W, H * C)

    # Patch-rows per grid step: smallest divisor of nW that makes the input
    # block's sublane dim (r*Wp) a multiple of 8 (aligned, unmasked tiles);
    # fall back to the full width (block == full dim is always legal).
    r = nW
    for cand in range(1, nW + 1):
        if nW % cand == 0 and (cand * Wp) % 8 == 0:
            r = cand
            break

    kernel = functools.partial(_patchify_kernel, r=r, nH=nH, Wp=Wp, HpC=HpC)
    out4 = pl.pallas_call(
        kernel,
        out_shape=jax.ShapeDtypeStruct((N, num_patches, Wp, HpC), images.dtype),
        grid_spec=pltpu.PrefetchScalarGridSpec(
            num_scalar_prefetch=0,
            grid=(N, nW // r),
            in_specs=[pl.BlockSpec((1, r * Wp, H * C), lambda n, t: (n, t, 0))],
            out_specs=pl.BlockSpec((1, r * nH, Wp, HpC), lambda n, t: (n, t, 0, 0)),
        ),
        compiler_params=pltpu.CompilerParams(
            dimension_semantics=("parallel", "parallel")),
    )(x2)

    # Free merge of the per-patch (Wp, Hp*C) dims -> patch_dim.
    return out4.reshape(N, num_patches, patch_dim)


if __name__ == "__main__":
    key = jax.random.PRNGKey(0)
    N, W, H, C = 2, 16, 16, 4
    Hp, Wp = 4, 4  # patch_height, patch_width

    images = jax.random.normal(key, (N, W, H, C), dtype=jnp.float32)

    out = patchify(images, Hp, Wp)
    jax.block_until_ready(out)

    # Pure-JAX reference reproducing torch unfold/permute/reshape semantics.
    ref = images.reshape(N, W // Wp, Wp, H // Hp, Hp, C)
    ref = ref.transpose(0, 1, 3, 2, 4, 5)          # (N, W//Wp, H//Hp, Wp, Hp, C)
    ref = ref.reshape(N, (W // Wp) * (H // Hp), Wp * Hp * C)

    assert out.shape == ref.shape, (out.shape, ref.shape)
    assert out.dtype == ref.dtype
    assert jnp.allclose(out, ref), "Pallas patchifier mismatch vs reference"
    print("KERNEL_OK")
</pallas_src>

<mosaic_0001>
module attributes {stable_mosaic.version = 11 : i64} {
  func.func @_patchify_kernel(%arg0: i32, %arg1: i32, %arg2: memref<1x8x64xf32, #tpu.memory_space<vmem>>, %arg3: memref<1x8x4x16xf32, #tpu.memory_space<vmem>>) attributes {dimension_semantics = [#tpu.dimension_semantics<parallel>, #tpu.dimension_semantics<parallel>], iteration_bounds = array<i64: 2, 2>, scalar_prefetch = 0 : i64, scratch_operands = 0 : i64, tpu.core_type = #tpu.core_type<tc>, window_params = [{transform_indices = @transform_0, window_bounds = array<i64: 1, 8, 64>}, {transform_indices = @transform_1, window_bounds = array<i64: 1, 8, 4, 16>}]} {
    %c0 = arith.constant 0 : index
    %c0_0 = arith.constant 0 : index
    %c0_1 = arith.constant 0 : index
    %0 = vector.load %arg2[%c0, %c0_0, %c0_1] : memref<1x8x64xf32, #tpu.memory_space<vmem>>, vector<1x4x16xf32>
    %1 = vector.shape_cast %0 : vector<1x4x16xf32> to vector<4x16xf32>
    %c0_2 = arith.constant 0 : index
    %c0_3 = arith.constant 0 : index
    %c0_4 = arith.constant 0 : index
    %c0_5 = arith.constant 0 : index
    %2 = vector.load %arg3[%c0_2, %c0_3, %c0_4, %c0_5] : memref<1x8x4x16xf32, #tpu.memory_space<vmem>>, vector<1x1x4x16xf32>
    %3 = vector.shape_cast %2 : vector<1x1x4x16xf32> to vector<4x16xf32>
    %4 = vector.shape_cast %1 : vector<4x16xf32> to vector<1x1x4x16xf32>
    tpu.vector_store %arg3[%c0_2, %c0_3, %c0_4, %c0_5], %4 {strides = array<i32>} : memref<1x8x4x16xf32, #tpu.memory_space<vmem>>, vector<1x1x4x16xf32>,
    %c0_6 = arith.constant 0 : index
    %c0_7 = arith.constant 0 : index
    %c16 = arith.constant 16 : index
    %5 = vector.load %arg2[%c0_6, %c0_7, %c16] : memref<1x8x64xf32, #tpu.memory_space<vmem>>, vector<1x4x16xf32>
    %6 = vector.shape_cast %5 : vector<1x4x16xf32> to vector<4x16xf32>
    %c0_8 = arith.constant 0 : index
    %c1 = arith.constant 1 : index
    %c0_9 = arith.constant 0 : index
    %c0_10 = arith.constant 0 : index
    %7 = vector.load %arg3[%c0_8, %c1, %c0_9, %c0_10] : memref<1x8x4x16xf32, #tpu.memory_space<vmem>>, vector<1x1x4x16xf32>
    %8 = vector.shape_cast %7 : vector<1x1x4x16xf32> to vector<4x16xf32>
    %9 = vector.shape_cast %6 : vector<4x16xf32> to vector<1x1x4x16xf32>
    tpu.vector_store %arg3[%c0_8, %c1, %c0_9, %c0_10], %9 {strides = array<i32>} : memref<1x8x4x16xf32, #tpu.memory_space<vmem>>, vector<1x1x4x16xf32>,
    %c0_11 = arith.constant 0 : index
    %c0_12 = arith.constant 0 : index
    %c32 = arith.constant 32 : index
    %10 = vector.load %arg2[%c0_11, %c0_12, %c32] : memref<1x8x64xf32, #tpu.memory_space<vmem>>, vector<1x4x16xf32>
    %11 = vector.shape_cast %10 : vector<1x4x16xf32> to vector<4x16xf32>
    %c0_13 = arith.constant 0 : index
    %c2 = arith.constant 2 : index
    %c0_14 = arith.constant 0 : index
    %c0_15 = arith.constant 0 : index
    %12 = vector.load %arg3[%c0_13, %c2, %c0_14, %c0_15] : memref<1x8x4x16xf32, #tpu.memory_space<vmem>>, vector<1x1x4x16xf32>
    %13 = vector.shape_cast %12 : vector<1x1x4x16xf32> to vector<4x16xf32>
    %14 = vector.shape_cast %11 : vector<4x16xf32> to vector<1x1x4x16xf32>
    tpu.vector_store %arg3[%c0_13, %c2, %c0_14, %c0_15], %14 {strides = array<i32>} : memref<1x8x4x16xf32, #tpu.memory_space<vmem>>, vector<1x1x4x16xf32>,
    %c0_16 = arith.constant 0 : index
    %c0_17 = arith.constant 0 : index
    %c48 = arith.constant 48 : index
    %15 = vector.load %arg2[%c0_16, %c0_17, %c48] : memref<1x8x64xf32, #tpu.memory_space<vmem>>, vector<1x4x16xf32>
    %16 = vector.shape_cast %15 : vector<1x4x16xf32> to vector<4x16xf32>
    %c0_18 = arith.constant 0 : index
    %c3 = arith.constant 3 : index
    %c0_19 = arith.constant 0 : index
    %c0_20 = arith.constant 0 : index
    %17 = vector.load %arg3[%c0_18, %c3, %c0_19, %c0_20] : memref<1x8x4x16xf32, #tpu.memory_space<vmem>>, vector<1x1x4x16xf32>
    %18 = vector.shape_cast %17 : vector<1x1x4x16xf32> to vector<4x16xf32>
    %19 = vector.shape_cast %16 : vector<4x16xf32> to vector<1x1x4x16xf32>
    tpu.vector_store %arg3[%c0_18, %c3, %c0_19, %c0_20], %19 {strides = array<i32>} : memref<1x8x4x16xf32, #tpu.memory_space<vmem>>, vector<1x1x4x16xf32>,
    %c0_21 = arith.constant 0 : index
    %c4 = arith.constant 4 : index
    %c0_22 = arith.constant 0 : index
    %20 = vector.load %arg2[%c0_21, %c4, %c0_22] : memref<1x8x64xf32, #tpu.memory_space<vmem>>, vector<1x4x16xf32>
    %21 = vector.shape_cast %20 : vector<1x4x16xf32> to vector<4x16xf32>
    %c0_23 = arith.constant 0 : index
    %c4_24 = arith.constant 4 : index
    %c0_25 = arith.constant 0 : index
    %c0_26 = arith.constant 0 : index
    %22 = vector.load %arg3[%c0_23, %c4_24, %c0_25, %c0_26] : memref<1x8x4x16xf32, #tpu.memory_space<vmem>>, vector<1x1x4x16xf32>
    %23 = vector.shape_cast %22 : vector<1x1x4x16xf32> to vector<4x16xf32>
    %24 = vector.shape_cast %21 : vector<4x16xf32> to vector<1x1x4x16xf32>
    tpu.vector_store %arg3[%c0_23, %c4_24, %c0_25, %c0_26], %24 {strides = array<i32>} : memref<1x8x4x16xf32, #tpu.memory_space<vmem>>, vector<1x1x4x16xf32>,
    %c0_27 = arith.constant 0 : index
    %c4_28 = arith.constant 4 : index
    %c16_29 = arith.constant 16 : index
    %25 = vector.load %arg2[%c0_27, %c4_28, %c16_29] : memref<1x8x64xf32, #tpu.memory_space<vmem>>, vector<1x4x16xf32>
    %26 = vector.shape_cast %25 : vector<1x4x16xf32> to vector<4x16xf32>
    %c0_30 = arith.constant 0 : index
    %c5 = arith.constant 5 : index
    %c0_31 = arith.constant 0 : index
    %c0_32 = arith.constant 0 : index
    %27 = vector.load %arg3[%c0_30, %c5, %c0_31, %c0_32] : memref<1x8x4x16xf32, #tpu.memory_space<vmem>>, vector<1x1x4x16xf32>
    %28 = vector.shape_cast %27 : vector<1x1x4x16xf32> to vector<4x16xf32>
    %29 = vector.shape_cast %26 : vector<4x16xf32> to vector<1x1x4x16xf32>
    tpu.vector_store %arg3[%c0_30, %c5, %c0_31, %c0_32], %29 {strides = array<i32>} : memref<1x8x4x16xf32, #tpu.memory_space<vmem>>, vector<1x1x4x16xf32>,
    %c0_33 = arith.constant 0 : index
    %c4_34 = arith.constant 4 : index
    %c32_35 = arith.constant 32 : index
    %30 = vector.load %arg2[%c0_33, %c4_34, %c32_35] : memref<1x8x64xf32, #tpu.memory_space<vmem>>, vector<1x4x16xf32>
    %31 = vector.shape_cast %30 : vector<1x4x16xf32> to vector<4x16xf32>
    %c0_36 = arith.constant 0 : index
    %c6 = arith.constant 6 : index
    %c0_37 = arith.constant 0 : index
    %c0_38 = arith.constant 0 : index
    %32 = vector.load %arg3[%c0_36, %c6, %c0_37, %c0_38] : memref<1x8x4x16xf32, #tpu.memory_space<vmem>>, vector<1x1x4x16xf32>
    %33 = vector.shape_cast %32 : vector<1x1x4x16xf32> to vector<4x16xf32>
    %34 = vector.shape_cast %31 : vector<4x16xf32> to vector<1x1x4x16xf32>
    tpu.vector_store %arg3[%c0_36, %c6, %c0_37, %c0_38], %34 {strides = array<i32>} : memref<1x8x4x16xf32, #tpu.memory_space<vmem>>, vector<1x1x4x16xf32>,
    %c0_39 = arith.constant 0 : index
    %c4_40 = arith.constant 4 : index
    %c48_41 = arith.constant 48 : index
    %35 = vector.load %arg2[%c0_39, %c4_40, %c48_41] : memref<1x8x64xf32, #tpu.memory_space<vmem>>, vector<1x4x16xf32>
    %36 = vector.shape_cast %35 : vector<1x4x16xf32> to vector<4x16xf32>
    %c0_42 = arith.constant 0 : index
    %c7 = arith.constant 7 : index
    %c0_43 = arith.constant 0 : index
    %c0_44 = arith.constant 0 : index
    %37 = vector.load %arg3[%c0_42, %c7, %c0_43, %c0_44] : memref<1x8x4x16xf32, #tpu.memory_space<vmem>>, vector<1x1x4x16xf32>
    %38 = vector.shape_cast %37 : vector<1x1x4x16xf32> to vector<4x16xf32>
    %39 = vector.shape_cast %36 : vector<4x16xf32> to vector<1x1x4x16xf32>
    tpu.vector_store %arg3[%c0_42, %c7, %c0_43, %c0_44], %39 {strides = array<i32>} : memref<1x8x4x16xf32, #tpu.memory_space<vmem>>, vector<1x1x4x16xf32>,
    return
  }
  func.func @transform_0(%arg0: i32, %arg1: i32) -> (i32, i32, i32) {
    %c0_i32 = arith.constant 0 : i32
    %c0_i32_0 = arith.constant 0 : i32
    return %arg0, %arg1, %c0_i32 : i32, i32, i32
  }
  func.func @transform_1(%arg0: i32, %arg1: i32) -> (i32, i32, i32, i32) {
    %c0_i32 = arith.constant 0 : i32
    %c0_i32_0 = arith.constant 0 : i32
    %c0_i32_1 = arith.constant 0 : i32
    return %arg0, %arg1, %c0_i32, %c0_i32_0 : i32, i32, i32, i32
  }
}

</mosaic_0001>

<llo_original>
// kernel: tpu_custom_call.1
$region0: #{tpu_custom_call.1}
  #allocation0 [shape = 'u32[]', space=smem, size = 0x4, offset = 0x4, fixed_abs, tag = 'smem constant byte address 0x4 - core index']
  #allocation1 [shape = 'u32[144,128]{1,0:T(1,128)}', space=vmem, size = 0x12000, scoped, tag = 'internal scratch']
  %s0 = inlined_call_operand.hbm [shape: f32[2,16,64], index: 0, kind: input, shape index: {}]
  %s1 = inlined_call_operand.hbm [shape: f32[2,16,4,16], index: 1, kind: output, shape index: {}]
  %s2 = sld [smem:[#allocation0]]
  $region41: #{tpu_custom_call.1} parent=0
    _
  %s4 = ssub.s32 1, %s2
  %s5 = scalar_select 0, %s4, %s2
  $region1: #{tpu_custom_call.1} parent=0
    #allocation2 [shape = 'u8[8192]{0}', space=vmem, size = 0x2000, scoped, tag = 'input window, operand 0']
    #allocation3 [shape = 's32[2]{0}', space=sflag, size = 0x8, scoped, tag = 'scoped memory for tpu_custom_call.1']
    #allocation4 [shape = 's32[2]{0}', space=sflag, size = 0x8, scoped, tag = 'scoped memory for tpu_custom_call.1']
    #allocation5 [shape = 'u8[32768]{0}', space=vmem, size = 0x8000, scoped, tag = 'output window, operand 0']
    %6 = vsyncpa [#allocation3], 0
    %s7 = scalar_lea.sflag [#allocation3], 1
    %8 = vsyncpa %s7, 0
    %9 = vsyncpa [#allocation4], 0
    %s10 = scalar_lea.sflag [#allocation4], 1
    %11 = vsyncpa %s10, 0
    loop: start=0, step=1, limit=6
    $region2: #{tpu_custom_call.1} parent=1 // loop_pre_header
      _
    $region3: #{tpu_custom_call.1} parent=1 // loop_header
      %s13 = sphi 0, %s17
      %p14 = scmp.ge.s32.totalorder %s13, 6
      %s20 = sphi 0, %s32
      %s21 = sphi 0, %s28
      %s22 = sphi 0, %s20
      %s23 = sphi 0, %s21
      %s24 = sphi 0, %s22
      %s25 = sphi 0, %s23
      %s37 = sphi 0, %s39
      %s40 = sphi 0, %s37
      %s41 = sphi 0, %s40
      %s57 = sphi 0, %s41
      %s65 = sphi 0, %s67
      %s68 = sphi 0, %s65
      %s69 = sphi 0, %s68
      %s85 = sphi 0, %s69
    $region4: #{tpu_custom_call.1} parent=1 // loop_header_branch
      %16 = sbr.rel (%p14) target = $region8
    $region5: #{tpu_custom_call.1} parent=1 // loop_body
      %s18 = ssub.s32 %s13, 1
      %s19 = ssub.s32 %s13, 2
      %s26 = sadd.s32 1, %s21
      %p27 = scmp.ge.s32.totalorder %s26, 2
      %s28 = scalar_select %p27, 0, %s26
      %s29 = sadd.s32 1, %s20
      %s30 = scalar_select %p27, %s29, %s20
      %p31 = scmp.ge.s32.totalorder %s30, 2
      %s32 = scalar_select %p31, 0, %s30
      %s33 = ssub.s32 %s20, %s32
      %s34 = ssub.s32 %s21, %s28
      %s35 = sor.u32 %s33, %s34
      %p36 = scmp.eq.s32.totalorder %s35, 0
      %s38 = sadd.s32 %s37, 1
      %s39 = scalar_select %p36, %s37, %s38
      %p42 = pneg %p36
      %p43 = scmp.eq.s32.totalorder %s13, 3
      %p44 = por %p42, %p43
      %p45 = scmp.ne.s32.totalorder %s37, %s40
      %p46 = scmp.eq.s32.totalorder %s13, 0
      %p47 = por %p45, %p46
      %p48 = scmp.ne.s32.totalorder %s37, %s40
      %p49 = scmp.eq.s32.totalorder %s18, 3
      %p50 = por %p48, %p49
      %p51 = scmp.ne.s32.totalorder %s40, %s41
      %p52 = scmp.eq.s32.totalorder %s18, 0
      %p53 = por %p51, %p52
      %p54 = scmp.ne.s32.totalorder %s40, %s41
      %p55 = scmp.eq.s32.totalorder %s19, 3
      %p56 = por %p54, %p55
      %p58 = scmp.ne.s32.totalorder %s41, %s57
      %p59 = scmp.eq.s32.totalorder %s19, 0
      %p60 = por %p58, %p59
      %s61 = ssub.s32 %s20, %s32
      %s62 = ssub.s32 %s21, %s28
      %s63 = sor.u32 %s61, %s62
      %p64 = scmp.eq.s32.totalorder %s63, 0
      %s66 = sadd.s32 %s65, 1
      %s67 = scalar_select %p64, %s65, %s66
      %p70 = pneg %p64
      %p71 = scmp.eq.s32.totalorder %s13, 3
      %p72 = por %p70, %p71
      %p73 = scmp.ne.s32.totalorder %s65, %s68
      %p74 = scmp.eq.s32.totalorder %s13, 0
      %p75 = por %p73, %p74
      %p76 = scmp.ne.s32.totalorder %s65, %s68
      %p77 = scmp.eq.s32.totalorder %s18, 3
      %p78 = por %p76, %p77
      %p79 = scmp.ne.s32.totalorder %s68, %s69
      %p80 = scmp.eq.s32.totalorder %s18, 0
      %p81 = por %p79, %p80
      %p82 = scmp.ne.s32.totalorder %s68, %s69
      %p83 = scmp.eq.s32.totalorder %s19, 3
      %p84 = por %p82, %p83
      %p86 = scmp.ne.s32.totalorder %s69, %s85
      %p87 = scmp.eq.s32.totalorder %s19, 0
      %p88 = por %p86, %p87
      %p89 = scmp.le.s32.totalorder 1, %s13
      %p90 = scmp.lt.s32.totalorder %s13, 5
      %p91 = pnand %p89, %p90
      %p92 = pneg %p91
      // Predicated region
      $region9: #{tpu_custom_call.1} parent=5 // pred_check
        _
      $region10: #{tpu_custom_call.1} parent=5 // pred_check_branch
        %94 = sbr.rel (%p91) target = $region12
      $region11: #{tpu_custom_call.1} parent=5 // pred_region
        %s95 = ssub.s32 %s13, 1
      $region12: #{tpu_custom_call.1} parent=5 // pred_fallthru
        _
      %p96 = scmp.lt.s32.totalorder %s13, 4
      // Predicated region
      $region13: #{tpu_custom_call.1} parent=5 // pred_check
        %p97 = pneg %p96
      $region14: #{tpu_custom_call.1} parent=5 // pred_check_branch
        %99 = sbr.rel (%p97) target = $region16
      $region15: #{tpu_custom_call.1} parent=5 // pred_region
        // Predicated region
        $region17: #{tpu_custom_call.1} parent=15 // pred_check
          %p100 = pneg %p47
        $region18: #{tpu_custom_call.1} parent=15 // pred_check_branch
          %102 = sbr.rel (%p100) target = $region20
        $region19: #{tpu_custom_call.1} parent=15 // pred_region
          %s103 = sand.u32 %s37, 1
          %s104 = scalar_lea.sflag [#allocation3], %s103
          %s105 = sand.u32 %s37, 1
          %s106 = smul.addr %s105, 8
          %s107 = scalar_lea.vmem [#allocation2], %s106
          %s109 = ssub.s32 128, 128
          %110 = vsyncadd %s104, %s109
          %s111 = smul.addr %s20, 2
          %s112 = sadd.s32 %s21, %s111
          %s113 = smul.addr %s112, 128
          %s114 = scalar_lea.hbm %s0, %s113
          %s116 = sshll.u32 %s107, 4
          %s117 = int_to_ptr.vmem [resolvable:$true] %s116
          %119 = dma.hbm_to_vmem [thread:$0]  %s114, 128, %s117, %s104
        $region20: #{tpu_custom_call.1} parent=15 // pred_fallthru
          _
      $region16: #{tpu_custom_call.1} parent=5 // pred_fallthru
        _
      %p120 = scmp.le.s32.totalorder 1, %s13
      %p121 = scmp.lt.s32.totalorder %s13, 5
      %p122 = pnand %p120, %p121
      %p123 = pneg %p122
      // Predicated region
      $region21: #{tpu_custom_call.1} parent=5 // pred_check
        _
      $region22: #{tpu_custom_call.1} parent=5 // pred_check_branch
        %125 = sbr.rel (%p122) target = $region24
      $region23: #{tpu_custom_call.1} parent=5 // pred_region
        %s126 = ssub.s32 %s13, 1
        %s127 = sand.u32 %s40, 1
        %s128 = scalar_lea.sflag [#allocation3], %s127
        %s129 = sand.u32 %s40, 1
        %s130 = smul.addr %s129, 8
        %s131 = scalar_lea.vmem [#allocation2], %s130
        // Predicated region
        $region25: #{tpu_custom_call.1} parent=23 // pred_check
          %p132 = pneg %p53
        $region26: #{tpu_custom_call.1} parent=23 // pred_check_branch
          %134 = sbr.rel (%p132) target = $region28
        $region27: #{tpu_custom_call.1} parent=23 // pred_region
          %135 = dma.done %s128, 128
        $region28: #{tpu_custom_call.1} parent=23 // pred_fallthru
          _
        %s136 = sand.u32 %s40, 1
        %s137 = scalar_lea.sflag [#allocation3], %s136
        %s138 = sand.u32 %s40, 1
        %s139 = smul.addr %s138, 8
        %s140 = scalar_lea.vmem [#allocation2], %s139
        %p141 = pneg %p53
        %p142 = pneg %p50
        %p143 = pneg %p81
        %p144 = pneg %p78
        %s145 = sand.u32 %s68, 1
        %s146 = scalar_lea.sflag [#allocation4], %s145
        %s147 = sand.u32 %s68, 1
        %s148 = smul.addr %s147, 32
        %s149 = scalar_lea.vmem [#allocation5], %s148
        %s150 = smul.u32 8, %s23
        %v151 = vld [vmem:[%s131] sm:$0xf]
        %vm152 = vcmask 125952
        %153 = vst.msk [vmem:[%s149] sm:$0xf] %vm152, %v151
        %v154 = vld [vmem:[%s131] sm:$0xf]
        %156 = vrot.lane.b32.xlu0 %v154, 112
        %v157 = vpop.permute.xlu0 %156
        %s159 = scalar_lea.vmem %s149, 4 [#allocation5]
        %160 = vst.msk [vmem:[%s159] sm:$0xf] %vm152, %v157
        %v161 = vld [vmem:[%s131] sm:$0xf]
        %163 = vrot.lane.b32.xlu0 %v161, 96
        %v164 = vpop.permute.xlu0 %163
        %s166 = scalar_lea.vmem %s149, 8 [#allocation5]
        %167 = vst.msk [vmem:[%s166] sm:$0xf] %vm152, %v164
        %v168 = vld [vmem:[%s131] sm:$0xf]
        %170 = vrot.lane.b32.xlu0 %v168, 80
        %v171 = vpop.permute.xlu0 %170
        %s173 = scalar_lea.vmem %s149, 12 [#allocation5]
        %174 = vst.msk [vmem:[%s173] sm:$0xf] %vm152, %v171
        %v175 = vld [vmem:[%s131 + $0x4] sm:$0xf]
        %s176 = scalar_lea.vmem %s149, 16 [#allocation5]
        %177 = vst.msk [vmem:[%s176] sm:$0xf] %vm152, %v175
        %v178 = vld [vmem:[%s131 + $0x4] sm:$0xf]
        %180 = vrot.lane.b32.xlu0 %v178, 112
        %v181 = vpop.permute.xlu0 %180
        %s183 = scalar_lea.vmem %s149, 20 [#allocation5]
        %184 = vst.msk [vmem:[%s183] sm:$0xf] %vm152, %v181
        %v185 = vld [vmem:[%s131 + $0x4] sm:$0xf]
        %187 = vrot.lane.b32.xlu0 %v185, 96
        %v188 = vpop.permute.xlu0 %187
        %s190 = scalar_lea.vmem %s149, 24 [#allocation5]
        %191 = vst.msk [vmem:[%s190] sm:$0xf] %vm152, %v188
        %v192 = vld [vmem:[%s131 + $0x4] sm:$0xf]
        %194 = vrot.lane.b32.xlu0 %v192, 80
        %v195 = vpop.permute.xlu0 %194
        %s197 = scalar_lea.vmem %s149, 28 [#allocation5]
        %198 = vst.msk [vmem:[%s197] sm:$0xf] %vm152, %v195
        %s199 = sand.u32 %s68, 1
        %s200 = scalar_lea.sflag [#allocation4], %s199
        %s201 = sand.u32 %s68, 1
        %s202 = smul.addr %s201, 32
        %s203 = scalar_lea.vmem [#allocation5], %s202
        // Predicated region
        $region29: #{tpu_custom_call.1} parent=23 // pred_check
          %p204 = pneg %p78
        $region30: #{tpu_custom_call.1} parent=23 // pred_check_branch
          %206 = sbr.rel (%p204) target = $region32
        $region31: #{tpu_custom_call.1} parent=23 // pred_region
          %s207 = smul.u32 8, %s23
          %s209 = ssub.s32 512, 512
          %210 = vsyncadd %s200, %s209
          %s211 = smul.addr %s22, 16
          %s212 = sadd.s32 %s207, %s211
          %s213 = smul.addr %s212, 64
          %s214 = scalar_lea.hbm %s1, %s213
          %s215 = sshll.u32 %s203, 4
          %s216 = int_to_ptr.vmem [resolvable:$true] %s215
          %221 = dma.vmem_to_hbm [thread:$0]  %s216, 512, %s214, %s200, 64, 64, 4
        $region32: #{tpu_custom_call.1} parent=23 // pred_fallthru
          _
      $region24: #{tpu_custom_call.1} parent=5 // pred_fallthru
        _
      %p222 = scmp.le.s32.totalorder 2, %s13
      // Predicated region
      $region33: #{tpu_custom_call.1} parent=5 // pred_check
        %p223 = pneg %p222
      $region34: #{tpu_custom_call.1} parent=5 // pred_check_branch
        %225 = sbr.rel (%p223) target = $region36
      $region35: #{tpu_custom_call.1} parent=5 // pred_region
        %s226 = ssub.s32 %s13, 2
        // Predicated region
        $region37: #{tpu_custom_call.1} parent=35 // pred_check
          %p227 = pneg %p84
        $region38: #{tpu_custom_call.1} parent=35 // pred_check_branch
          %229 = sbr.rel (%p227) target = $region40
        $region39: #{tpu_custom_call.1} parent=35 // pred_region
          %s230 = sand.u32 %s69, 1
          %s231 = scalar_lea.sflag [#allocation4], %s230
          %s232 = sand.u32 %s69, 1
          %s233 = smul.addr %s232, 32
          %s234 = scalar_lea.vmem [#allocation5], %s233
          %235 = dma.done %s231, 512
        $region40: #{tpu_custom_call.1} parent=35 // pred_fallthru
          _
      $region36: #{tpu_custom_call.1} parent=5 // pred_fallthru
        _
    $region6: #{tpu_custom_call.1} parent=1 // loop_footer
      %s17 = sadd.s32 1, %s13
    $region7: #{tpu_custom_call.1} parent=1 // loop_footer_branch
      %12 = sbr.rel target = $region3
    $region8: #{tpu_custom_call.1} parent=1 // loop_exit
      _
    %236 = vsyncpa [#allocation3], 1
    %s237 = scalar_lea.sflag [#allocation3], 1
    %238 = vsyncpa %s237, 1
    %239 = vsyncpa [#allocation4], 1
    %s240 = scalar_lea.sflag [#allocation4], 1
    %241 = vsyncpa %s240, 1

</llo_original>
